<compile_context>
chip_gen: v6e
topology: v6e:2x2x1
jax: 0.10.0
libtpu: 0.0.40
codegen_flags: <defaults>
</compile_context>

<pallas_src>
import functools

import jax
import jax.numpy as jnp
from jax.experimental import pallas as pl
from jax.experimental.pallas import tpu as pltpu


_VMEM_LIMIT_BYTES = 32 * 1024 * 1024        # explicit scoped-VMEM limit (portable v5e/v6e/v7x)
_VMEM_PIPELINE_BUDGET = 20 * 1024 * 1024    # budget for double-buffered tiles (headroom under limit)


def _round_up(x, m):
    return ((x + m - 1) // m) * m


def _pick_block_n(c, itemsize):
    """Rows per tile so that (logits + targets + loss) double-buffered fits the budget."""
    lanes = _round_up(max(c, 1), 128)
    # Per-row VMEM bytes of one buffer set (lane padding included):
    #   logits row (lanes * itemsize) + targets row ((bn,1) int32 padded to 128 lanes)
    #   + loss row ((bn,1) f32 padded to 128 lanes)
    per_row = lanes * itemsize + 128 * 4 + 128 * 4
    single_buffer_budget = _VMEM_PIPELINE_BUDGET // 2
    return max(8, (single_buffer_budget // per_row) // 8 * 8)


def _focal_loss_kernel(t_ref, a_ref, x_ref, loss_ref, *, gamma):
    x = x_ref[...].astype(jnp.float32)        # (bn, C) logits, upcast for softmax math
    t = t_ref[...]                            # (bn, 1) int32 targets
    a = a_ref[...].astype(jnp.float32)        # (1, C)  per-class alpha

    # log_softmax along the class (lane) axis.
    m = jnp.max(x, axis=-1, keepdims=True)
    shifted = x - m
    lse = jnp.log(jnp.sum(jnp.exp(shifted), axis=-1, keepdims=True))
    log_prob = shifted - lse                  # (bn, C)

    # Gather log p_t and alpha_t at the target class via a one-hot mask.
    cls = jax.lax.broadcasted_iota(jnp.int32, x.shape, 1)   # (bn, C)
    onehot = cls == t                                        # broadcast (bn,1) -> (bn,C)
    log_pt = jnp.sum(jnp.where(onehot, log_prob, 0.0), axis=-1, keepdims=True)  # (bn, 1)
    alpha_t = jnp.sum(jnp.where(onehot, a, 0.0), axis=-1, keepdims=True)        # (bn, 1)
    pt = jnp.exp(log_pt)

    one_minus_pt = jnp.maximum(1.0 - pt, 0.0)
    g = float(gamma)
    if g == 0.0:
        fw = jnp.ones_like(pt)
    elif g.is_integer() and 1.0 <= g <= 4.0:
        # Integer gamma: repeated multiply (VPU) instead of pow (EUP exp+log), no NaN at pt==1.
        fw = one_minus_pt
        for _ in range(int(g) - 1):
            fw = fw * one_minus_pt
    else:
        fw = one_minus_pt ** g
    fw = alpha_t * fw

    loss_ref[...] = (-fw * log_pt).astype(loss_ref.dtype)    # per-sample loss (bn, 1)


def focal_loss(inputs, targets, *, alpha=None, gamma=2.0, reduction="mean", block_n=None):
    """Focal loss. inputs: [N, C] float (f32/bf16), targets: [N] int.

    alpha may be None, a python scalar, or a per-class array of shape [C].
    reduction in {'none', 'mean', 'sum'} (matches the PyTorch module).
    """
    n, c = inputs.shape
    itemsize = jnp.dtype(inputs.dtype).itemsize

    cap = _pick_block_n(c, itemsize) if block_n is None else max(8, _round_up(int(block_n), 8))
    num_tiles = max(1, pl.cdiv(n, cap))
    block = _round_up(pl.cdiv(n, num_tiles), 8)
    n_pad = block * num_tiles

    x = inputs
    t = targets.astype(jnp.int32)
    if n_pad != n:
        x = jnp.pad(x, ((0, n_pad - n), (0, 0)))
        t = jnp.pad(t, ((0, n_pad - n),))
    t2d = t.reshape(n_pad, 1)

    if alpha is None:
        a_vec = jnp.ones((1, c), jnp.float32)
    else:
        a_arr = jnp.asarray(alpha, jnp.float32)
        if a_arr.ndim == 0:
            a_vec = jnp.broadcast_to(a_arr, (1, c))
        else:
            a_vec = a_arr.reshape(1, c)

    kernel = functools.partial(_focal_loss_kernel, gamma=float(gamma))

    losses = pl.pallas_call(
        kernel,
        out_shape=jax.ShapeDtypeStruct((n_pad, 1), jnp.float32),
        grid_spec=pltpu.PrefetchScalarGridSpec(
            num_scalar_prefetch=0,
            grid=(num_tiles,),
            in_specs=[
                pl.BlockSpec((block, 1), lambda i: (i, 0)),   # targets
                pl.BlockSpec((1, c), lambda i: (0, 0)),        # per-class alpha (constant block)
                pl.BlockSpec((block, c), lambda i: (i, 0)),    # logits
            ],
            out_specs=pl.BlockSpec((block, 1), lambda i: (i, 0)),
        ),
        compiler_params=pltpu.CompilerParams(
            dimension_semantics=("parallel",),                 # independent row tiles
            vmem_limit_bytes=_VMEM_LIMIT_BYTES,
        ),
    )(t2d, a_vec, x)

    per_sample = losses[:n, 0]
    if reduction == "none":
        return per_sample
    if reduction == "sum":
        return jnp.sum(per_sample)
    return jnp.mean(per_sample)


def _focal_loss_ref(inputs, targets, *, alpha=None, gamma=2.0, reduction="mean"):
    log_prob = jax.nn.log_softmax(inputs.astype(jnp.float32), axis=-1)
    prob = jnp.exp(log_prob)
    t = targets.reshape(-1, 1)
    log_pt = jnp.take_along_axis(log_prob, t, axis=1)
    pt = jnp.take_along_axis(prob, t, axis=1)
    w = (1.0 - pt) ** gamma
    if alpha is not None:
        a = jnp.asarray(alpha, jnp.float32)
        if a.ndim == 0:
            w = a * w
        else:
            w = a[targets].reshape(-1, 1) * w
    loss = -w * log_pt
    if reduction == "none":
        return loss[:, 0]
    if reduction == "sum":
        return loss.sum()
    return loss.mean()


if __name__ == "__main__":
    key = jax.random.PRNGKey(0)
    k1, k2, k3, k4, k5 = jax.random.split(key, 5)

    # Test 1: small shapes, f32 logits, scalar alpha, reduction='mean' (module defaults).
    N, C = 8, 32
    logits = jax.random.normal(k1, (N, C), dtype=jnp.float32)
    targets = jax.random.randint(k2, (N,), 0, C, dtype=jnp.int32)

    loss = focal_loss(logits, targets, alpha=0.25, gamma=2.0)
    loss = jax.block_until_ready(loss)
    ref = _focal_loss_ref(logits, targets, alpha=0.25, gamma=2.0)
    assert jnp.allclose(loss, ref, rtol=1e-5, atol=1e-6), (loss, ref)

    # Test 2: bf16 logits, per-class (tensor) alpha, N not divisible by the tile,
    # forced small block_n to exercise the multi-tile parallel grid + padding path.
    N2, C2 = 300, 32
    logits2 = jax.random.normal(k3, (N2, C2), dtype=jnp.bfloat16)
    targets2 = jax.random.randint(k4, (N2,), 0, C2, dtype=jnp.int32)
    alpha_vec = jax.random.uniform(k5, (C2,), dtype=jnp.float32)

    loss2 = focal_loss(logits2, targets2, alpha=alpha_vec, gamma=2.0, block_n=128)
    loss2 = jax.block_until_ready(loss2)
    ref2 = _focal_loss_ref(logits2, targets2, alpha=alpha_vec, gamma=2.0)
    assert jnp.allclose(loss2, ref2, rtol=1e-4, atol=1e-5), (loss2, ref2)

    print("KERNEL_OK")
</pallas_src>

<mosaic_0001>
module attributes {stable_mosaic.version = 11 : i64} {
  func.func @_focal_loss_kernel(%arg0: i32, %arg1: memref<8x1xi32, #tpu.memory_space<vmem>>, %arg2: memref<1x32xf32, #tpu.memory_space<vmem>>, %arg3: memref<8x32xf32, #tpu.memory_space<vmem>>, %arg4: memref<8x1xf32, #tpu.memory_space<vmem>>) attributes {dimension_semantics = [#tpu.dimension_semantics<parallel>], iteration_bounds = array<i64: 1>, scalar_prefetch = 0 : i64, scratch_operands = 0 : i64, tpu.core_type = #tpu.core_type<tc>, window_params = [{transform_indices = @transform_0, window_bounds = array<i64: 8, 1>}, {pipeline_mode = #tpu.pipeline_mode<synchronous>, transform_indices = @transform_1, window_bounds = array<i64: 1, 32>}, {transform_indices = @transform_2, window_bounds = array<i64: 8, 32>}, {transform_indices = @transform_3, window_bounds = array<i64: 8, 1>}]} {
    %c0 = arith.constant 0 : index
    %c0_0 = arith.constant 0 : index
    %0 = vector.load %arg3[%c0, %c0_0] : memref<8x32xf32, #tpu.memory_space<vmem>>, vector<8x32xf32>
    %c0_1 = arith.constant 0 : index
    %c0_2 = arith.constant 0 : index
    %1 = vector.load %arg1[%c0_1, %c0_2] : memref<8x1xi32, #tpu.memory_space<vmem>>, vector<8x1xi32>
    %c0_3 = arith.constant 0 : index
    %c0_4 = arith.constant 0 : index
    %2 = vector.load %arg2[%c0_3, %c0_4] : memref<1x32xf32, #tpu.memory_space<vmem>>, vector<1x32xf32>
    %cst = arith.constant dense<0xFF800000> : vector<8xf32>
    %3 = vector.multi_reduction <maximumf>, %0, %cst [1] : vector<8x32xf32> to vector<8xf32>
    %4 = vector.shape_cast %3 : vector<8xf32> to vector<8x1xf32>
    %5 = vector.broadcast %4 : vector<8x1xf32> to vector<8x32xf32>
    %6 = arith.subf %0, %5 : vector<8x32xf32>
    %7 = math.exp %6 : vector<8x32xf32>
    %cst_5 = arith.constant dense<0.000000e+00> : vector<8xf32>
    %8 = vector.multi_reduction <add>, %7, %cst_5 [1] : vector<8x32xf32> to vector<8xf32>
    %9 = vector.shape_cast %8 : vector<8xf32> to vector<8x1xf32>
    %10 = math.log %9 : vector<8x1xf32>
    %11 = vector.broadcast %10 : vector<8x1xf32> to vector<8x32xf32>
    %12 = arith.subf %6, %11 : vector<8x32xf32>
    %13 = tpu.iota {dimensions = array<i32: 1>} : vector<8x32xi32>
    %14 = vector.broadcast %1 : vector<8x1xi32> to vector<8x32xi32>
    %15 = arith.cmpi eq, %13, %14 : vector<8x32xi32>
    %cst_6 = arith.constant 0.000000e+00 : f32
    %16 = vector.broadcast %cst_6 : f32 to vector<8x32xf32>
    %17 = arith.select %15, %12, %16 : vector<8x32xi1>, vector<8x32xf32>
    %cst_7 = arith.constant dense<0.000000e+00> : vector<8xf32>
    %18 = vector.multi_reduction <add>, %17, %cst_7 [1] : vector<8x32xf32> to vector<8xf32>
    %19 = vector.shape_cast %18 : vector<8xf32> to vector<8x1xf32>
    %cst_8 = arith.constant 0.000000e+00 : f32
    %20 = vector.shape_cast %2 : vector<1x32xf32> to vector<1x32xf32>
    %21 = vector.broadcast %20 : vector<1x32xf32> to vector<8x32xf32>
    %22 = vector.broadcast %cst_8 : f32 to vector<8x32xf32>
    %23 = arith.select %15, %21, %22 : vector<8x32xi1>, vector<8x32xf32>
    %cst_9 = arith.constant dense<0.000000e+00> : vector<8xf32>
    %24 = vector.multi_reduction <add>, %23, %cst_9 [1] : vector<8x32xf32> to vector<8xf32>
    %25 = vector.shape_cast %24 : vector<8xf32> to vector<8x1xf32>
    %26 = math.exp %19 : vector<8x1xf32>
    %cst_10 = arith.constant 1.000000e+00 : f32
    %27 = vector.broadcast %cst_10 : f32 to vector<8x1xf32>
    %28 = arith.subf %27, %26 : vector<8x1xf32>
    %cst_11 = arith.constant 0.000000e+00 : f32
    %29 = vector.broadcast %cst_11 : f32 to vector<8x1xf32>
    %30 = arith.maximumf %28, %29 : vector<8x1xf32>
    %31 = arith.mulf %30, %30 : vector<8x1xf32>
    %32 = arith.mulf %25, %31 : vector<8x1xf32>
    %cst_12 = arith.constant 0.000000e+00 : f32
    %33 = vector.broadcast %cst_12 : f32 to vector<8x1xf32>
    %34 = arith.subf %33, %32 : vector<8x1xf32>
    %35 = arith.mulf %34, %19 : vector<8x1xf32>
    %c0_13 = arith.constant 0 : index
    %c0_14 = arith.constant 0 : index
    %36 = vector.load %arg4[%c0_13, %c0_14] : memref<8x1xf32, #tpu.memory_space<vmem>>, vector<8x1xf32>
    tpu.vector_store %arg4[%c0_13, %c0_14], %35 {strides = array<i32>} : memref<8x1xf32, #tpu.memory_space<vmem>>, vector<8x1xf32>,
    return
  }
  func.func @transform_0(%arg0: i32) -> (i32, i32) {
    %c0_i32 = arith.constant 0 : i32
    %c0_i32_0 = arith.constant 0 : i32
    return %arg0, %c0_i32 : i32, i32
  }
  func.func @transform_1(%arg0: i32) -> (i32, i32) {
    %c0_i32 = arith.constant 0 : i32
    %c0_i32_0 = arith.constant 0 : i32
    %c0_i32_1 = arith.constant 0 : i32
    return %c0_i32, %c0_i32_0 : i32, i32
  }
  func.func @transform_2(%arg0: i32) -> (i32, i32) {
    %c0_i32 = arith.constant 0 : i32
    %c0_i32_0 = arith.constant 0 : i32
    return %arg0, %c0_i32 : i32, i32
  }
  func.func @transform_3(%arg0: i32) -> (i32, i32) {
    %c0_i32 = arith.constant 0 : i32
    %c0_i32_0 = arith.constant 0 : i32
    return %arg0, %c0_i32 : i32, i32
  }
}

</mosaic_0001>

<llo_original>
// kernel: tpu_custom_call.1
$region0: #{tpu_custom_call.1}
  #allocation0 [shape = 'u32[]', space=smem, size = 0x4, offset = 0x4, fixed_abs, tag = 'smem constant byte address 0x4 - core index']
  #allocation1 [shape = 'u32[144,128]{1,0:T(1,128)}', space=vmem, size = 0x12000, scoped, tag = 'internal scratch']
  %s0 = inlined_call_operand.vmem [shape: s32[8,1], index: 0, kind: input, shape index: {}]
  %s1 = inlined_call_operand.vmem [shape: f32[1,32], index: 1, kind: input, shape index: {}]
  %s2 = inlined_call_operand.vmem [shape: f32[8,32], index: 2, kind: input, shape index: {}]
  %s3 = inlined_call_operand.vmem [shape: f32[8,1], index: 3, kind: output, shape index: {}]
  %s4 = sld [smem:[#allocation0]]
  $region22: #{tpu_custom_call.1} parent=0
    _
  %s6 = ssub.s32 1, %s4
  %s7 = scalar_select 0, %s6, %s4
  // Predicated region
  $region2: #{tpu_custom_call.1} parent=0 // pred_check
    _
  $region3: #{tpu_custom_call.1} parent=0 // pred_check_branch
    %9 = sbr.rel (0) target = $region5
  $region4: #{tpu_custom_call.1} parent=0 // pred_region
    _
  $region5: #{tpu_custom_call.1} parent=0 // pred_fallthru
    _
  // Predicated region
  $region6: #{tpu_custom_call.1} parent=0 // pred_check
    _
  $region7: #{tpu_custom_call.1} parent=0 // pred_check_branch
    %11 = sbr.rel (0) target = $region9
  $region8: #{tpu_custom_call.1} parent=0 // pred_region
    _
  $region9: #{tpu_custom_call.1} parent=0 // pred_fallthru
    _
  // Predicated region
  $region10: #{tpu_custom_call.1} parent=0 // pred_check
    _
  $region11: #{tpu_custom_call.1} parent=0 // pred_check_branch
    %13 = sbr.rel (0) target = $region13
  $region12: #{tpu_custom_call.1} parent=0 // pred_region
    _
  $region13: #{tpu_custom_call.1} parent=0 // pred_fallthru
    _
  %v14 = vld [vmem:[%s2] sm:$0xff]
  %v15 = vld [vmem:[%s0] sm:$0xff]
  %v16 = vld [vmem:[%s1] sm:$0x1]
  %vm17 = vcmask 261120
  %v18 = vsel %vm17, %v14, -inf
  %19 = vmax.xlane.f32.xlu0 %v18
  %v20 = vpop.xlane.xlu0 %19
  %v21 = vsub.f32 %v14, %v20
  %v22 = vmul.f32 %v21, 1.442695
  %v23 = vpow.pop %v22
  %v24 = vsel %vm17, %v23, 0.0
  %25 = vadd.xlane.f32.xlu0 %v24
  %v26 = vpop.xlane.xlu0 %25
  %v27 = vlog2.pop %v26
  %v28 = vmul.f32 %v27, 0.6931472
  %v29 = vsub.f32 %v21, %v28
  %v30 = vlaneseq
  %v31 = vand.u32 %v30, 127
  %32 = vset.pattern.permute.xlu0 0
  %33 = vperm.xlu0 %32, %v15
  %v34 = vpop.permute.xlu0 %33
  %vm35 = vcmp.eq.s32.totalorder %v31, %v34
  %v36 = vsel %vm35, %v29, 0.0
  %v37 = vsel %vm17, %v36, 0.0
  %38 = vadd.xlane.f32.xlu0 %v37
  %v39 = vpop.xlane.xlu0 %38
  %v41 = vlaneseq
  %v42 = vshrl.u32 %v41, 7
  %v43 = vsub.s32 0, %v42
  %v44 = vrot.slane %v16, %v43
  %v46 = vsel %vm35, %v44, 0.0
  %v47 = vsel %vm17, %v46, 0.0
  %48 = vadd.xlane.f32.xlu0 %v47
  %v49 = vpop.xlane.xlu0 %48
  %v50 = vmul.f32 %v39, 1.442695
  %v51 = vpow.pop %v50
  %v52 = vsub.f32 1.0, %v51
  %v53 = vmax.f32 %v52, 0.0
  %v54 = vmul.f32 %v53, %v53
  %v55 = vmul.f32 %v49, %v54
  %v56 = vsub.f32 0.0, %v55
  %v57 = vmul.f32 %v56, %v39
  %vm58 = vcmask 7168
  %59 = vst.msk [vmem:[%s3] sm:$0xff] %vm58, %v57
  // Predicated region
  $region14: #{tpu_custom_call.1} parent=0 // pred_check
    _
  $region15: #{tpu_custom_call.1} parent=0 // pred_check_branch
    %61 = sbr.rel (0) target = $region17
  $region16: #{tpu_custom_call.1} parent=0 // pred_region
    _
  $region17: #{tpu_custom_call.1} parent=0 // pred_fallthru
    _
  // Predicated region
  $region18: #{tpu_custom_call.1} parent=0 // pred_check
    _
  $region19: #{tpu_custom_call.1} parent=0 // pred_check_branch
    %63 = sbr.rel (0) target = $region21
  $region20: #{tpu_custom_call.1} parent=0 // pred_region
    _
  $region21: #{tpu_custom_call.1} parent=0 // pred_fallthru
    _

</llo_original>
